<compile_context>
chip_gen: v7x
topology: tpu7x:2x2x1
jax: 0.10.0
libtpu: 0.0.40
codegen_flags: <defaults>
</compile_context>

<pallas_src>
import functools

import jax
import jax.numpy as jnp
from jax.experimental import pallas as pl
from jax.experimental.pallas import tpu as pltpu

ALPHA = 0.5
BETA = 0.5

_LANES = 128
_SUBLANES = 8
_TILE = _SUBLANES * _LANES                    # 1024 elements
_TARGET_INPUT_VMEM_BYTES = 16 * 1024 * 1024   # 2 inputs x 2 buffers x tile budget
_MAX_BLOCK_ROWS = 32768
_VMEM_LIMIT_BYTES = 48 * 1024 * 1024          # under v7x's 64 MiB physical VMEM


def _num_splits():
    """Use the 2-way outer 'parallel' split only on 2-TensorCore chips (v7x)."""
    try:
        kind = jax.devices()[0].device_kind.lower()
    except Exception:
        return 1
    return 2 if "v7" in kind else 1
    # TODO(synk): if an xprof profile on v7x shows one idle TensorCore, switch
    # the outer grid axis to pltpu.CORE_PARALLEL (plain "parallel" may not shard).


def _sigmoid(x):
    # 0.5*tanh(0.5*x)+0.5 == logistic sigmoid; keeps the transcendental on the
    # EUP slot instead of a VPU divide/Newton sequence.
    return 0.5 * jnp.tanh(0.5 * x) + 0.5


def _accumulate(o_ref, p, t, block_rows):
    pt = p * t

    def fold(a):
        # (block_rows,128) -> (block_rows//8, 8, 128) is aligned to the (8,128)
        # vreg tile, so the reshape is layout-preserving (free).
        # TODO(synk): confirm in the Mosaic MLIR dump that no VMEM copy appears.
        return jnp.sum(a.reshape(block_rows // _SUBLANES, _SUBLANES, _LANES), axis=0)

    o_ref[0, 0] += fold(pt)   # sum(p * t)  -> TP
    o_ref[0, 1] += fold(p)    # sum(p)      -> TP + FP
    o_ref[0, 2] += fold(t)    # sum(t)      -> TP + FN


def _tversky_kernel(x_ref, t_ref, o_ref, *, block_rows, inner_blocks, rows):
    o = pl.program_id(0)   # parallel split (megacore on v7x)
    i = pl.program_id(1)   # sequential sweep over row-tiles of this split

    # Per-split accumulator lives in the resident output block.
    @pl.when(i == 0)
    def _():
        o_ref[...] = jnp.zeros_like(o_ref)

    # Logical (unclamped) global block index.  Masking is needed only when the
    # block's logical row range extends past `rows` (partial edge block, or a
    # clamped duplicate block of an uneven split).
    gb = o * inner_blocks + i
    row0 = gb * block_rows
    needs_mask = row0 + block_rows > rows

    @pl.when(jnp.logical_not(needs_mask))
    def _fast():
        # Interior blocks: no iota, no compares, no selects -> pure stream.
        x = x_ref[...].astype(jnp.float32)
        t = t_ref[...].astype(jnp.float32)
        _accumulate(o_ref, _sigmoid(x), t, block_rows)

    @pl.when(needs_mask)
    def _masked():
        x = x_ref[...].astype(jnp.float32)
        t = t_ref[...].astype(jnp.float32)
        row_ids = jax.lax.broadcasted_iota(jnp.int32, (block_rows, _LANES), 0) + row0
        valid = row_ids < rows
        p = jnp.where(valid, _sigmoid(x), 0.0)   # also kills stale/garbage reads
        t = jnp.where(valid, t, 0.0)
        _accumulate(o_ref, p, t, block_rows)


def tversky_loss(inputs, targets, smooth=1.0, alpha=ALPHA, beta=BETA):
    """Pallas TPU implementation of TverskyLoss.forward. Returns a scalar f32."""
    x = jnp.ravel(inputs)    # keep caller dtype: bf16 inputs stream half the bytes
    t = jnp.ravel(targets)
    n = x.shape[0]

    n_main = (n // _TILE) * _TILE
    tail = n - n_main

    # Partial sums: [sum(p*t), sum(p), sum(t)].
    sums = jnp.zeros((3,), jnp.float32)

    if n_main:
        xm = x if tail == 0 else x[:n_main]
        tm = t if tail == 0 else t[:n_main]
        rows = n_main // _LANES            # multiple of 8 by construction
        x2 = xm.reshape(rows, _LANES)
        t2 = tm.reshape(rows, _LANES)

        # Dtype-scaled row tile: double-buffered inputs stay ~16 MiB total.
        bytes_per_row = _LANES * (x2.dtype.itemsize + t2.dtype.itemsize)
        vmem_rows = _TARGET_INPUT_VMEM_BYTES // (2 * bytes_per_row)
        vmem_rows = max(_SUBLANES, (vmem_rows // _SUBLANES) * _SUBLANES)
        block_rows = min(vmem_rows, _MAX_BLOCK_ROWS, rows)

        num_splits = _num_splits()
        total_blocks = pl.cdiv(rows, block_rows)
        inner_blocks = pl.cdiv(total_blocks, num_splits)

        def in_map(o, i):
            # Clamp so no DMA is fully out of bounds; the in-kernel mask zeroes
            # any duplicated data from clamped blocks.
            return (jnp.minimum(o * inner_blocks + i, total_blocks - 1), 0)

        kernel = functools.partial(
            _tversky_kernel,
            block_rows=block_rows,
            inner_blocks=inner_blocks,
            rows=rows,
        )

        partials = pl.pallas_call(
            kernel,
            out_shape=jax.ShapeDtypeStruct(
                (num_splits, 3, _SUBLANES, _LANES), jnp.float32),
            grid_spec=pltpu.PrefetchScalarGridSpec(
                num_scalar_prefetch=0,
                grid=(num_splits, inner_blocks),
                in_specs=[
                    pl.BlockSpec((block_rows, _LANES), in_map),
                    pl.BlockSpec((block_rows, _LANES), in_map),
                ],
                out_specs=pl.BlockSpec(
                    (1, 3, _SUBLANES, _LANES), lambda o, i: (o, 0, 0, 0)),
            ),
            compiler_params=pltpu.CompilerParams(
                dimension_semantics=("parallel", "arbitrary"),
                vmem_limit_bytes=_VMEM_LIMIT_BYTES,
            ),
        )(x2, t2)

        sums = sums + jnp.sum(partials, axis=(0, 2, 3))

    if tail:
        # <1024-element ragged tail folded in a tiny pure-JAX epilogue instead
        # of rewriting the whole tensor with a padding concatenate.
        xt = x[n_main:].astype(jnp.float32)
        tt = t[n_main:].astype(jnp.float32)
        pt = jax.nn.sigmoid(xt)
        sums = sums + jnp.stack([jnp.sum(pt * tt), jnp.sum(pt), jnp.sum(tt)])

    tp = sums[0]
    fp = sums[1] - tp
    fn = sums[2] - tp
    tversky = (tp + smooth) / (tp + alpha * fp + beta * fn + smooth)
    return 1.0 - tversky


def _tversky_ref(inputs, targets, smooth=1.0, alpha=ALPHA, beta=BETA):
    p = jax.nn.sigmoid(inputs.astype(jnp.float32)).ravel()
    t = targets.astype(jnp.float32).ravel()
    TP = jnp.sum(p * t)
    FP = jnp.sum((1.0 - t) * p)
    FN = jnp.sum(t * (1.0 - p))
    return 1.0 - (TP + smooth) / (TP + alpha * FP + beta * FN + smooth)


if __name__ == "__main__":
    key = jax.random.PRNGKey(0)
    k1, k2, k3, k4 = jax.random.split(key, 4)

    # Test 1: aligned NCHW f32 logits/targets (copy-free path, numel % 1024 == 0).
    B, C, H, W = 2, 4, 16, 16
    logits = jax.random.normal(k1, (B, C, H, W), dtype=jnp.float32)
    targets = (jax.random.uniform(k2, (B, C, H, W)) > 0.5).astype(jnp.float32)
    loss = jax.block_until_ready(tversky_loss(logits, targets))
    ref = jax.block_until_ready(_tversky_ref(logits, targets))
    assert jnp.allclose(loss, ref, atol=1e-5, rtol=1e-5), (loss, ref)

    # Test 2: ragged bf16 inputs (aligned prefix in-kernel + pure-JAX tail).
    B2, C2, H2, W2 = 2, 3, 15, 17
    logits2 = jax.random.normal(k3, (B2, C2, H2, W2), dtype=jnp.bfloat16)
    targets2 = (jax.random.uniform(k4, (B2, C2, H2, W2)) > 0.5).astype(jnp.bfloat16)
    loss2 = jax.block_until_ready(tversky_loss(logits2, targets2))
    ref2 = jax.block_until_ready(_tversky_ref(logits2, targets2))
    assert jnp.allclose(loss2, ref2, atol=1e-4, rtol=1e-4), (loss2, ref2)

    print("KERNEL_OK")
</pallas_src>

<mosaic_0001>
module attributes {stable_mosaic.version = 11 : i64} {
  func.func @_tversky_kernel(%arg0: i32, %arg1: i32, %arg2: memref<16x128xf32, #tpu.memory_space<vmem>>, %arg3: memref<16x128xf32, #tpu.memory_space<vmem>>, %arg4: memref<1x3x8x128xf32, #tpu.memory_space<vmem>>) attributes {dimension_semantics = [#tpu.dimension_semantics<parallel>, #tpu.dimension_semantics<arbitrary>], iteration_bounds = array<i64: 1, 1>, scalar_prefetch = 0 : i64, scratch_operands = 0 : i64, tpu.core_type = #tpu.core_type<tc>, window_params = [{transform_indices = @transform_0, window_bounds = array<i64: 16, 128>}, {transform_indices = @transform_1, window_bounds = array<i64: 16, 128>}, {transform_indices = @transform_2, window_bounds = array<i64: 1, 3, 8, 128>}]} {
    %c0_i32 = arith.constant 0 : i32
    %0 = arith.cmpi eq, %arg1, %c0_i32 : i32
    %1 = arith.extui %0 : i1 to i32
    %c0_i32_0 = arith.constant 0 : i32
    %2 = arith.cmpi ne, %1, %c0_i32_0 : i32
    scf.if %2 {
      %cst = arith.constant 0.000000e+00 : f32
      %13 = vector.broadcast %cst : f32 to vector<1x3x8x128xf32>
      %c0 = arith.constant 0 : index
      %c0_5 = arith.constant 0 : index
      %c0_6 = arith.constant 0 : index
      %c0_7 = arith.constant 0 : index
      %14 = vector.load %arg4[%c0, %c0_5, %c0_6, %c0_7] : memref<1x3x8x128xf32, #tpu.memory_space<vmem>>, vector<1x3x8x128xf32>
      tpu.vector_store %arg4[%c0, %c0_5, %c0_6, %c0_7], %13 {strides = array<i32>} : memref<1x3x8x128xf32, #tpu.memory_space<vmem>>, vector<1x3x8x128xf32>,
    } else {
    }
    %c1_i32 = arith.constant 1 : i32
    %3 = arith.muli %arg0, %c1_i32 : i32
    %4 = arith.addi %3, %arg1 : i32
    %c16_i32 = arith.constant 16 : i32
    %5 = arith.muli %4, %c16_i32 : i32
    %c16_i32_1 = arith.constant 16 : i32
    %6 = arith.addi %5, %c16_i32_1 : i32
    %c16_i32_2 = arith.constant 16 : i32
    %7 = arith.cmpi sgt, %6, %c16_i32_2 : i32
    %true = arith.constant true
    %8 = arith.xori %7, %true : i1
    %9 = arith.extui %8 : i1 to i32
    %c0_i32_3 = arith.constant 0 : i32
    %10 = arith.cmpi ne, %9, %c0_i32_3 : i32
    scf.if %10 {
      %c0 = arith.constant 0 : index
      %c0_5 = arith.constant 0 : index
      %13 = vector.load %arg2[%c0, %c0_5] : memref<16x128xf32, #tpu.memory_space<vmem>>, vector<16x128xf32>
      %c0_6 = arith.constant 0 : index
      %c0_7 = arith.constant 0 : index
      %14 = vector.load %arg3[%c0_6, %c0_7] : memref<16x128xf32, #tpu.memory_space<vmem>>, vector<16x128xf32>
      %cst = arith.constant 5.000000e-01 : f32
      %15 = vector.broadcast %cst : f32 to vector<16x128xf32>
      %16 = arith.mulf %15, %13 : vector<16x128xf32>
      %17 = math.tanh %16 : vector<16x128xf32>
      %cst_8 = arith.constant 5.000000e-01 : f32
      %18 = vector.broadcast %cst_8 : f32 to vector<16x128xf32>
      %19 = arith.mulf %18, %17 : vector<16x128xf32>
      %cst_9 = arith.constant 5.000000e-01 : f32
      %20 = vector.broadcast %cst_9 : f32 to vector<16x128xf32>
      %21 = arith.addf %19, %20 : vector<16x128xf32>
      %22 = arith.mulf %21, %14 : vector<16x128xf32>
      %c0_10 = arith.constant 0 : index
      %c0_11 = arith.constant 0 : index
      %c0_12 = arith.constant 0 : index
      %c0_13 = arith.constant 0 : index
      %23 = vector.load %arg4[%c0_10, %c0_11, %c0_12, %c0_13] : memref<1x3x8x128xf32, #tpu.memory_space<vmem>>, vector<1x1x8x128xf32>
      %24 = vector.shape_cast %23 : vector<1x1x8x128xf32> to vector<8x128xf32>
      %25 = vector.shape_cast %22 : vector<16x128xf32> to vector<2x8x128xf32>
      %cst_14 = arith.constant dense<0.000000e+00> : vector<8x128xf32>
      %26 = vector.multi_reduction <add>, %25, %cst_14 [0] : vector<2x8x128xf32> to vector<8x128xf32>
      %27 = arith.addf %24, %26 : vector<8x128xf32>
      %c0_15 = arith.constant 0 : index
      %c0_16 = arith.constant 0 : index
      %c0_17 = arith.constant 0 : index
      %c0_18 = arith.constant 0 : index
      %28 = vector.load %arg4[%c0_15, %c0_16, %c0_17, %c0_18] : memref<1x3x8x128xf32, #tpu.memory_space<vmem>>, vector<1x1x8x128xf32>
      %29 = vector.shape_cast %28 : vector<1x1x8x128xf32> to vector<8x128xf32>
      %30 = vector.shape_cast %27 : vector<8x128xf32> to vector<1x1x8x128xf32>
      tpu.vector_store %arg4[%c0_15, %c0_16, %c0_17, %c0_18], %30 {strides = array<i32>} : memref<1x3x8x128xf32, #tpu.memory_space<vmem>>, vector<1x1x8x128xf32>,
      %c0_19 = arith.constant 0 : index
      %c1 = arith.constant 1 : index
      %c0_20 = arith.constant 0 : index
      %c0_21 = arith.constant 0 : index
      %31 = vector.load %arg4[%c0_19, %c1, %c0_20, %c0_21] : memref<1x3x8x128xf32, #tpu.memory_space<vmem>>, vector<1x1x8x128xf32>
      %32 = vector.shape_cast %31 : vector<1x1x8x128xf32> to vector<8x128xf32>
      %33 = vector.shape_cast %21 : vector<16x128xf32> to vector<2x8x128xf32>
      %cst_22 = arith.constant dense<0.000000e+00> : vector<8x128xf32>
      %34 = vector.multi_reduction <add>, %33, %cst_22 [0] : vector<2x8x128xf32> to vector<8x128xf32>
      %35 = arith.addf %32, %34 : vector<8x128xf32>
      %c0_23 = arith.constant 0 : index
      %c1_24 = arith.constant 1 : index
      %c0_25 = arith.constant 0 : index
      %c0_26 = arith.constant 0 : index
      %36 = vector.load %arg4[%c0_23, %c1_24, %c0_25, %c0_26] : memref<1x3x8x128xf32, #tpu.memory_space<vmem>>, vector<1x1x8x128xf32>
      %37 = vector.shape_cast %36 : vector<1x1x8x128xf32> to vector<8x128xf32>
      %38 = vector.shape_cast %35 : vector<8x128xf32> to vector<1x1x8x128xf32>
      tpu.vector_store %arg4[%c0_23, %c1_24, %c0_25, %c0_26], %38 {strides = array<i32>} : memref<1x3x8x128xf32, #tpu.memory_space<vmem>>, vector<1x1x8x128xf32>,
      %c0_27 = arith.constant 0 : index
      %c2 = arith.constant 2 : index
      %c0_28 = arith.constant 0 : index
      %c0_29 = arith.constant 0 : index
      %39 = vector.load %arg4[%c0_27, %c2, %c0_28, %c0_29] : memref<1x3x8x128xf32, #tpu.memory_space<vmem>>, vector<1x1x8x128xf32>
      %40 = vector.shape_cast %39 : vector<1x1x8x128xf32> to vector<8x128xf32>
      %41 = vector.shape_cast %14 : vector<16x128xf32> to vector<2x8x128xf32>
      %cst_30 = arith.constant dense<0.000000e+00> : vector<8x128xf32>
      %42 = vector.multi_reduction <add>, %41, %cst_30 [0] : vector<2x8x128xf32> to vector<8x128xf32>
      %43 = arith.addf %40, %42 : vector<8x128xf32>
      %c0_31 = arith.constant 0 : index
      %c2_32 = arith.constant 2 : index
      %c0_33 = arith.constant 0 : index
      %c0_34 = arith.constant 0 : index
      %44 = vector.load %arg4[%c0_31, %c2_32, %c0_33, %c0_34] : memref<1x3x8x128xf32, #tpu.memory_space<vmem>>, vector<1x1x8x128xf32>
      %45 = vector.shape_cast %44 : vector<1x1x8x128xf32> to vector<8x128xf32>
      %46 = vector.shape_cast %43 : vector<8x128xf32> to vector<1x1x8x128xf32>
      tpu.vector_store %arg4[%c0_31, %c2_32, %c0_33, %c0_34], %46 {strides = array<i32>} : memref<1x3x8x128xf32, #tpu.memory_space<vmem>>, vector<1x1x8x128xf32>,
    } else {
    }
    %11 = arith.extui %7 : i1 to i32
    %c0_i32_4 = arith.constant 0 : i32
    %12 = arith.cmpi ne, %11, %c0_i32_4 : i32
    scf.if %12 {
      %c0 = arith.constant 0 : index
      %c0_5 = arith.constant 0 : index
      %13 = vector.load %arg2[%c0, %c0_5] : memref<16x128xf32, #tpu.memory_space<vmem>>, vector<16x128xf32>
      %c0_6 = arith.constant 0 : index
      %c0_7 = arith.constant 0 : index
      %14 = vector.load %arg3[%c0_6, %c0_7] : memref<16x128xf32, #tpu.memory_space<vmem>>, vector<16x128xf32>
      %15 = tpu.iota {dimensions = array<i32: 0>} : vector<16x128xi32>
      %16 = vector.broadcast %5 : i32 to vector<16x128xi32>
      %17 = arith.addi %15, %16 : vector<16x128xi32>
      %c16_i32_8 = arith.constant 16 : i32
      %18 = vector.broadcast %c16_i32_8 : i32 to vector<16x128xi32>
      %19 = arith.cmpi slt, %17, %18 : vector<16x128xi32>
      %cst = arith.constant 5.000000e-01 : f32
      %20 = vector.broadcast %cst : f32 to vector<16x128xf32>
      %21 = arith.mulf %20, %13 : vector<16x128xf32>
      %22 = math.tanh %21 : vector<16x128xf32>
      %cst_9 = arith.constant 5.000000e-01 : f32
      %23 = vector.broadcast %cst_9 : f32 to vector<16x128xf32>
      %24 = arith.mulf %23, %22 : vector<16x128xf32>
      %cst_10 = arith.constant 5.000000e-01 : f32
      %25 = vector.broadcast %cst_10 : f32 to vector<16x128xf32>
      %26 = arith.addf %24, %25 : vector<16x128xf32>
      %cst_11 = arith.constant 0.000000e+00 : f32
      %27 = vector.broadcast %cst_11 : f32 to vector<16x128xf32>
      %28 = arith.select %19, %26, %27 : vector<16x128xi1>, vector<16x128xf32>
      %cst_12 = arith.constant 0.000000e+00 : f32
      %29 = vector.broadcast %cst_12 : f32 to vector<16x128xf32>
      %30 = arith.select %19, %14, %29 : vector<16x128xi1>, vector<16x128xf32>
      %31 = arith.mulf %28, %30 : vector<16x128xf32>
      %c0_13 = arith.constant 0 : index
      %c0_14 = arith.constant 0 : index
      %c0_15 = arith.constant 0 : index
      %c0_16 = arith.constant 0 : index
      %32 = vector.load %arg4[%c0_13, %c0_14, %c0_15, %c0_16] : memref<1x3x8x128xf32, #tpu.memory_space<vmem>>, vector<1x1x8x128xf32>
      %33 = vector.shape_cast %32 : vector<1x1x8x128xf32> to vector<8x128xf32>
      %34 = vector.shape_cast %31 : vector<16x128xf32> to vector<2x8x128xf32>
      %cst_17 = arith.constant dense<0.000000e+00> : vector<8x128xf32>
      %35 = vector.multi_reduction <add>, %34, %cst_17 [0] : vector<2x8x128xf32> to vector<8x128xf32>
      %36 = arith.addf %33, %35 : vector<8x128xf32>
      %c0_18 = arith.constant 0 : index
      %c0_19 = arith.constant 0 : index
      %c0_20 = arith.constant 0 : index
      %c0_21 = arith.constant 0 : index
      %37 = vector.load %arg4[%c0_18, %c0_19, %c0_20, %c0_21] : memref<1x3x8x128xf32, #tpu.memory_space<vmem>>, vector<1x1x8x128xf32>
      %38 = vector.shape_cast %37 : vector<1x1x8x128xf32> to vector<8x128xf32>
      %39 = vector.shape_cast %36 : vector<8x128xf32> to vector<1x1x8x128xf32>
      tpu.vector_store %arg4[%c0_18, %c0_19, %c0_20, %c0_21], %39 {strides = array<i32>} : memref<1x3x8x128xf32, #tpu.memory_space<vmem>>, vector<1x1x8x128xf32>,
      %c0_22 = arith.constant 0 : index
      %c1 = arith.constant 1 : index
      %c0_23 = arith.constant 0 : index
      %c0_24 = arith.constant 0 : index
      %40 = vector.load %arg4[%c0_22, %c1, %c0_23, %c0_24] : memref<1x3x8x128xf32, #tpu.memory_space<vmem>>, vector<1x1x8x128xf32>
      %41 = vector.shape_cast %40 : vector<1x1x8x128xf32> to vector<8x128xf32>
      %42 = vector.shape_cast %28 : vector<16x128xf32> to vector<2x8x128xf32>
      %cst_25 = arith.constant dense<0.000000e+00> : vector<8x128xf32>
      %43 = vector.multi_reduction <add>, %42, %cst_25 [0] : vector<2x8x128xf32> to vector<8x128xf32>
      %44 = arith.addf %41, %43 : vector<8x128xf32>
      %c0_26 = arith.constant 0 : index
      %c1_27 = arith.constant 1 : index
      %c0_28 = arith.constant 0 : index
      %c0_29 = arith.constant 0 : index
      %45 = vector.load %arg4[%c0_26, %c1_27, %c0_28, %c0_29] : memref<1x3x8x128xf32, #tpu.memory_space<vmem>>, vector<1x1x8x128xf32>
      %46 = vector.shape_cast %45 : vector<1x1x8x128xf32> to vector<8x128xf32>
      %47 = vector.shape_cast %44 : vector<8x128xf32> to vector<1x1x8x128xf32>
      tpu.vector_store %arg4[%c0_26, %c1_27, %c0_28, %c0_29], %47 {strides = array<i32>} : memref<1x3x8x128xf32, #tpu.memory_space<vmem>>, vector<1x1x8x128xf32>,
      %c0_30 = arith.constant 0 : index
      %c2 = arith.constant 2 : index
      %c0_31 = arith.constant 0 : index
      %c0_32 = arith.constant 0 : index
      %48 = vector.load %arg4[%c0_30, %c2, %c0_31, %c0_32] : memref<1x3x8x128xf32, #tpu.memory_space<vmem>>, vector<1x1x8x128xf32>
      %49 = vector.shape_cast %48 : vector<1x1x8x128xf32> to vector<8x128xf32>
      %50 = vector.shape_cast %30 : vector<16x128xf32> to vector<2x8x128xf32>
      %cst_33 = arith.constant dense<0.000000e+00> : vector<8x128xf32>
      %51 = vector.multi_reduction <add>, %50, %cst_33 [0] : vector<2x8x128xf32> to vector<8x128xf32>
      %52 = arith.addf %49, %51 : vector<8x128xf32>
      %c0_34 = arith.constant 0 : index
      %c2_35 = arith.constant 2 : index
      %c0_36 = arith.constant 0 : index
      %c0_37 = arith.constant 0 : index
      %53 = vector.load %arg4[%c0_34, %c2_35, %c0_36, %c0_37] : memref<1x3x8x128xf32, #tpu.memory_space<vmem>>, vector<1x1x8x128xf32>
      %54 = vector.shape_cast %53 : vector<1x1x8x128xf32> to vector<8x128xf32>
      %55 = vector.shape_cast %52 : vector<8x128xf32> to vector<1x1x8x128xf32>
      tpu.vector_store %arg4[%c0_34, %c2_35, %c0_36, %c0_37], %55 {strides = array<i32>} : memref<1x3x8x128xf32, #tpu.memory_space<vmem>>, vector<1x1x8x128xf32>,
    } else {
    }
    return
  }
  func.func @transform_0(%arg0: i32, %arg1: i32) -> (i32, i32) {
    %c1_i32 = arith.constant 1 : i32
    %0 = arith.muli %arg0, %c1_i32 : i32
    %1 = arith.addi %0, %arg1 : i32
    %c0_i32 = arith.constant 0 : i32
    %2 = arith.minsi %1, %c0_i32 : i32
    %c0_i32_0 = arith.constant 0 : i32
    %c0_i32_1 = arith.constant 0 : i32
    return %2, %c0_i32_0 : i32, i32
  }
  func.func @transform_1(%arg0: i32, %arg1: i32) -> (i32, i32) {
    %c1_i32 = arith.constant 1 : i32
    %0 = arith.muli %arg0, %c1_i32 : i32
    %1 = arith.addi %0, %arg1 : i32
    %c0_i32 = arith.constant 0 : i32
    %2 = arith.minsi %1, %c0_i32 : i32
    %c0_i32_0 = arith.constant 0 : i32
    %c0_i32_1 = arith.constant 0 : i32
    return %2, %c0_i32_0 : i32, i32
  }
  func.func @transform_2(%arg0: i32, %arg1: i32) -> (i32, i32, i32, i32) {
    %c0_i32 = arith.constant 0 : i32
    %c0_i32_0 = arith.constant 0 : i32
    %c0_i32_1 = arith.constant 0 : i32
    %c0_i32_2 = arith.constant 0 : i32
    return %arg0, %c0_i32, %c0_i32_0, %c0_i32_1 : i32, i32, i32, i32
  }
}

</mosaic_0001>

<llo_original>
// kernel: tpu_custom_call.1
$region0: #{tpu_custom_call.1}
  #allocation0 [shape = 'u32[]', space=smem, size = 0x4, offset = 0x4, fixed_abs, tag = 'smem constant byte address 0x4 - core index']
  #allocation1 [shape = 'u32[144,128]{1,0:T(1,128)}', space=vmem, size = 0x12000, scoped, tag = 'internal scratch']
  %s0 = inlined_call_operand.hbm [shape: f32[16,128], index: 0, kind: input, shape index: {}]
  %s1 = inlined_call_operand.hbm [shape: f32[16,128], index: 1, kind: input, shape index: {}]
  %s2 = inlined_call_operand.hbm [shape: f32[1,3,8,128], index: 2, kind: output, shape index: {}]
  %s3 = sld [smem:[#allocation0]]
  $region38: #{tpu_custom_call.1} parent=0
    _
  %s5 = ssub.s32 1, %s3
  %s6 = scalar_select 0, %s5, %s3
  $region1: #{tpu_custom_call.1} parent=0
    #allocation2 [shape = 'u8[8192]{0}', space=vmem, size = 0x2000, scoped, tag = 'input window, operand 0, single buffered']
    #allocation3 [shape = 's32[1]{0}', space=sflag, size = 0x4, scoped, tag = 'scoped memory for tpu_custom_call.1']
    #allocation4 [shape = 's32[1]{0}', space=sflag, size = 0x4, scoped, tag = 'scoped memory for tpu_custom_call.1']
    #allocation5 [shape = 'u8[8192]{0}', space=vmem, size = 0x2000, scoped, tag = 'input window, operand 1, single buffered']
    #allocation6 [shape = 's32[1]{0}', space=sflag, size = 0x4, scoped, tag = 'scoped memory for tpu_custom_call.1']
    #allocation7 [shape = 'u8[12288]{0}', space=vmem, size = 0x3000, scoped, tag = 'output window, operand 0, single buffered']
    %7 = vsyncpa [#allocation3], 0
    %8 = vsyncpa [#allocation6], 0
    %9 = vsyncpa [#allocation4], 0
    // Predicated region
    $region2: #{tpu_custom_call.1} parent=1 // pred_check
      _
    $region3: #{tpu_custom_call.1} parent=1 // pred_check_branch
      %11 = sbr.rel (0) target = $region5
    $region4: #{tpu_custom_call.1} parent=1 // pred_region
      %s12 = sadd.s32 0, 0
      %p13 = scmp.lt.s32.totalorder %s12, 0
      %s14 = scalar_select %p13, %s12, 0
      %s15 = smul.u32 2, %s14
      %s17 = ssub.s32 256, 256
      %18 = vsyncadd [#allocation3], %s17
      %s19 = smul.addr %s15, 128
      %s20 = scalar_lea.hbm %s0, %s19
      %s21 = sshll.u32 [#allocation2], 4
      %s22 = int_to_ptr.vmem [resolvable:$true] %s21
      %27 = dma.hbm_to_vmem [thread:$0]  %s20, 256, %s22, [#allocation3], 128, 128, 8
    $region5: #{tpu_custom_call.1} parent=1 // pred_fallthru
      _
    // Predicated region
    $region6: #{tpu_custom_call.1} parent=1 // pred_check
      _
    $region7: #{tpu_custom_call.1} parent=1 // pred_check_branch
      %29 = sbr.rel (0) target = $region9
    $region8: #{tpu_custom_call.1} parent=1 // pred_region
      %s30 = sadd.s32 0, 0
      %p31 = scmp.lt.s32.totalorder %s30, 0
      %s32 = scalar_select %p31, %s30, 0
      %s33 = smul.u32 2, %s32
      %s35 = ssub.s32 256, 256
      %36 = vsyncadd [#allocation6], %s35
      %s37 = smul.addr %s33, 128
      %s38 = scalar_lea.hbm %s1, %s37
      %s39 = sshll.u32 [#allocation5], 4
      %s40 = int_to_ptr.vmem [resolvable:$true] %s39
      %45 = dma.hbm_to_vmem [thread:$0]  %s38, 256, %s40, [#allocation6], 128, 128, 8
    $region9: #{tpu_custom_call.1} parent=1 // pred_fallthru
      _
    // Predicated region
    $region10: #{tpu_custom_call.1} parent=1 // pred_check
      _
    $region11: #{tpu_custom_call.1} parent=1 // pred_check_branch
      %47 = sbr.rel (0) target = $region13
    $region12: #{tpu_custom_call.1} parent=1 // pred_region
      %48 = dma.done [#allocation3], 256
    $region13: #{tpu_custom_call.1} parent=1 // pred_fallthru
      _
    // Predicated region
    $region14: #{tpu_custom_call.1} parent=1 // pred_check
      _
    $region15: #{tpu_custom_call.1} parent=1 // pred_check_branch
      %50 = sbr.rel (0) target = $region17
    $region16: #{tpu_custom_call.1} parent=1 // pred_region
      %51 = dma.done [#allocation6], 256
    $region17: #{tpu_custom_call.1} parent=1 // pred_fallthru
      _
    %s52 = sadd.s32 0, 0
    %p53 = scmp.lt.s32.totalorder %s52, 0
    %s54 = scalar_select %p53, %s52, 0
    %s55 = smul.u32 2, %s54
    %s56 = sadd.s32 0, 0
    %p57 = scmp.lt.s32.totalorder %s56, 0
    %s58 = scalar_select %p57, %s56, 0
    %s59 = smul.u32 2, %s58
    %p60 = scmp.eq.s32.totalorder 0, 0
    // Predicated region
    $region18: #{tpu_custom_call.1} parent=1 // pred_check
      %p61 = pneg %p60
    $region19: #{tpu_custom_call.1} parent=1 // pred_check_branch
      %63 = sbr.rel (%p61) target = $region21
    $region20: #{tpu_custom_call.1} parent=1 // pred_region
      %64 = vst [vmem:[#allocation7] sm:$0xff] 0.0
      %65 = vst [vmem:[#allocation7 + $0x8] sm:$0xff] 0.0
      %66 = vst [vmem:[#allocation7 + $0x10] sm:$0xff] 0.0
    $region21: #{tpu_custom_call.1} parent=1 // pred_fallthru
      _
    %s67 = sadd.s32 0, 0
    %s68 = smul.u32 %s67, 16
    %s69 = sadd.s32 %s68, 16
    %p70 = scmp.gt.s32.totalorder %s69, 16
    %p71 = scmp.le.s32.totalorder %s69, 16
    // Predicated region
    $region22: #{tpu_custom_call.1} parent=1 // pred_check
      %p72 = pneg %p71
    $region23: #{tpu_custom_call.1} parent=1 // pred_check_branch
      %74 = sbr.rel (%p72) target = $region25
    $region24: #{tpu_custom_call.1} parent=1 // pred_region
      %v75 = vld [vmem:[#allocation2] sm:$0xff]
      %v76 = vld [vmem:[#allocation2 + $0x8] sm:$0xff]
      %v77 = vld [vmem:[#allocation5] sm:$0xff]
      %v78 = vld [vmem:[#allocation5 + $0x8] sm:$0xff]
      %v79 = vmul.f32 %v75, 0.5
      %v80 = vmul.f32 %v76, 0.5
      %v81 = vtanh.pop %v79
      %v82 = vtanh.pop %v80
      %v83 = vmul.f32 %v81, 0.5
      %v84 = vmul.f32 %v82, 0.5
      %v85 = vadd.f32 %v83, 0.5
      %v86 = vadd.f32 %v84, 0.5
      %v87 = vmul.f32 %v85, %v77
      %v88 = vmul.f32 %v86, %v78
      %v89 = vld [vmem:[#allocation7] sm:$0xff]
      %v90 = vadd.f32 %v87, %v88
      %v91 = vadd.f32 %v89, %v90
      %92 = vst [vmem:[#allocation7] sm:$0xff] %v91
      %s93 = scalar_lea.vmem [#allocation7], 8
      %v94 = vld [vmem:[%s93] sm:$0xff]
      %v95 = vadd.f32 %v85, %v86
      %v96 = vadd.f32 %v94, %v95
      %97 = vst [vmem:[%s93] sm:$0xff] %v96
      %s98 = scalar_lea.vmem [#allocation7], 16
      %v99 = vld [vmem:[%s98] sm:$0xff]
      %v100 = vadd.f32 %v77, %v78
      %v101 = vadd.f32 %v99, %v100
      %102 = vst [vmem:[%s98] sm:$0xff] %v101
    $region25: #{tpu_custom_call.1} parent=1 // pred_fallthru
      _
    // Predicated region
    $region26: #{tpu_custom_call.1} parent=1 // pred_check
      %p103 = pneg %p70
    $region27: #{tpu_custom_call.1} parent=1 // pred_check_branch
      %105 = sbr.rel (%p103) target = $region29
    $region28: #{tpu_custom_call.1} parent=1 // pred_region
      %v106 = vld [vmem:[#allocation2] sm:$0xff]
      %v107 = vld [vmem:[#allocation2 + $0x8] sm:$0xff]
      %v108 = vld [vmem:[#allocation5] sm:$0xff]
      %v109 = vld [vmem:[#allocation5 + $0x8] sm:$0xff]
      %v110 = vlaneseq
      %v111 = vshrl.u32 %v110, 7
      %v112 = vadd.s32 %v111, 8
      %v113 = vstv %s68
      %v114 = vadd.s32 %v111, %v113
      %v115 = vadd.s32 %v112, %v113
      %vm116 = vcmp.lt.s32.totalorder %v114, 16
      %vm117 = vcmp.lt.s32.totalorder %v115, 16
      %v118 = vmul.f32 %v106, 0.5
      %v119 = vmul.f32 %v107, 0.5
      %v120 = vtanh.pop %v118
      %v121 = vtanh.pop %v119
      %v122 = vmul.f32 %v120, 0.5
      %v123 = vmul.f32 %v121, 0.5
      %v124 = vadd.f32 %v122, 0.5
      %v125 = vadd.f32 %v123, 0.5
      %v126 = vsel %vm116, %v124, 0.0
      %v127 = vsel %vm117, %v125, 0.0
      %v128 = vsel %vm116, %v108, 0.0
      %v129 = vsel %vm117, %v109, 0.0
      %v130 = vmul.f32 %v126, %v128
      %v131 = vmul.f32 %v127, %v129
      %v132 = vld [vmem:[#allocation7] sm:$0xff]
      %v133 = vadd.f32 %v130, %v131
      %v134 = vadd.f32 %v132, %v133
      %135 = vst [vmem:[#allocation7] sm:$0xff] %v134
      %s136 = scalar_lea.vmem [#allocation7], 8
      %v137 = vld [vmem:[%s136] sm:$0xff]
      %v138 = vadd.f32 %v126, %v127
      %v139 = vadd.f32 %v137, %v138
      %140 = vst [vmem:[%s136] sm:$0xff] %v139
      %s141 = scalar_lea.vmem [#allocation7], 16
      %v142 = vld [vmem:[%s141] sm:$0xff]
      %v143 = vadd.f32 %v128, %v129
      %v144 = vadd.f32 %v142, %v143
      %145 = vst [vmem:[%s141] sm:$0xff] %v144
    $region29: #{tpu_custom_call.1} parent=1 // pred_fallthru
      _
    // Predicated region
    $region30: #{tpu_custom_call.1} parent=1 // pred_check
      _
    $region31: #{tpu_custom_call.1} parent=1 // pred_check_branch
      %147 = sbr.rel (0) target = $region33
    $region32: #{tpu_custom_call.1} parent=1 // pred_region
      %s149 = ssub.s32 384, 384
      %150 = vsyncadd [#allocation4], %s149
      %s151 = sshll.u32 [#allocation7], 4
      %s152 = int_to_ptr.vmem [resolvable:$true] %s151
      %157 = dma.vmem_to_hbm [thread:$0]  %s152, 384, %s2, [#allocation4], 128, 128, 8
    $region33: #{tpu_custom_call.1} parent=1 // pred_fallthru
      _
    // Predicated region
    $region34: #{tpu_custom_call.1} parent=1 // pred_check
      _
    $region35: #{tpu_custom_call.1} parent=1 // pred_check_branch
      %159 = sbr.rel (0) target = $region37
    $region36: #{tpu_custom_call.1} parent=1 // pred_region
      %160 = dma.done [#allocation4], 384
    $region37: #{tpu_custom_call.1} parent=1 // pred_fallthru
      _
    %161 = vsyncpa [#allocation3], 1
    %162 = vsyncpa [#allocation6], 1
    %163 = vsyncpa [#allocation4], 1

</llo_original>
